<compile_context>
chip_gen: v7x
topology: tpu7x:2x2x1
jax: 0.10.0
libtpu: 0.0.40
codegen_flags: <defaults>
</compile_context>

<pallas_src>
import jax
import jax.numpy as jnp
from jax.experimental import pallas as pl
from jax.experimental.pallas import tpu as pltpu

K_SPLINE = 3  # spline order k=3 (KAN(width=[F, O], grid=5, k=3))


def neural_predicate_kernel(x_ref, grid_ref, recl_ref, recr_ref, coef_ref,
                            sb_ref, sp_ref, bias_ref, rw_ref, out_ref):
    x = x_ref[...]        # (F, TB)   batch on lanes
    g = grid_ref[...]     # (F, G_EXT) shared per-feature extended grid
    recl = recl_ref[...]  # (K, F, G_EXT-2)  precomputed 1/(g[d:-1]-g[:-(d+1)]) (zero padded)
    recr = recr_ref[...]  # (K, F, G_EXT-2)  precomputed 1/(g[d+1:]-g[1:-d])   (zero padded)
    coef = coef_ref[...]  # (O, F, G)  spline coefficients, out-major edge ordering
    sb = sb_ref[...]      # (O, F)     scale_base
    sp = sp_ref[...]      # (O, F)     scale_sp
    bias = bias_ref[...]  # (O, 1)     KAN output bias
    rw = rw_ref[...]      # (R, O)     rule weights

    F, TB = x.shape
    G_EXT = g.shape[1]
    O, _, G = coef.shape

    xg = x[:, None, :]                      # (F, 1, TB)
    gl = g[:, :, None]                      # (F, G_EXT, 1)

    # --- degree-0 indicator basis, per feature (shared across all O outputs) ---
    basis = ((xg >= gl[:, :-1]).astype(jnp.float32) *
             (xg < gl[:, 1:]).astype(jnp.float32))       # (F, G_EXT-1, TB)

    # --- Cox-de Boor recursion: pure multiply-add, denominators hoisted to the wrapper ---
    for d in range(1, K_SPLINE + 1):
        n = G_EXT - 1 - d
        left = (xg - gl[:, :n]) * recl[d - 1, :, :n, None] * basis[:, :-1]
        right = (gl[:, d + 1:] - xg) * recr[d - 1, :, :n, None] * basis[:, 1:]
        basis = left + right                              # (F, n, TB)
    # basis: (F, G, TB) with G = num + k

    # --- spline_{o,f}(x_f) = sum_g coef[o,f,g] * B_g(x_f); unrolled vreg accumulation ---
    spline = coef[:, :, 0, None] * basis[None, :, 0, :]   # (O, F, TB)
    for gi in range(1, G):
        spline = spline + coef[:, :, gi, None] * basis[None, :, gi, :]

    # --- SiLU residual path, shared across outputs ---
    silu = x * (1.0 / (1.0 + jnp.exp(-x)))                # (F, TB)

    y = sb[:, :, None] * silu[None, :, :] + sp[:, :, None] * spline   # (O, F, TB)
    kan = jnp.sum(y, axis=1) + bias                       # (O, TB)

    # --- rule layer: sigmoid-gated combination of predicates; VPU only (O, R tiny) ---
    srw = 1.0 / (1.0 + jnp.exp(-rw))                      # (R, O)
    rules = jnp.sum(srw[:, :, None] * kan[None, :, :], axis=1)   # (R, TB)
    out_ref[...] = rules.astype(out_ref.dtype)


def neural_predicate_forward(x, grid_ext, coef, scale_base, scale_sp, bias, rule_w,
                             *, tile_b=256):
    """x: (B, F); grid_ext: (O*F, num+2k+1); coef: (O*F, num+k);
    scale_base/scale_sp: (1, O*F); bias: (1, O); rule_w: (R, O). Returns (B, R)."""
    B, F = x.shape
    SIZE, G_EXT = grid_ext.shape
    O = SIZE // F
    G = coef.shape[1]
    R = rule_w.shape[0]

    # Shared-grid assumption (pykan init: every edge carries an identical grid).
    # TODO(synk): if update_grid ever diverges per-edge grids, fall back to a per-edge basis.
    grid_f = grid_ext.reshape(O, F, G_EXT)[0].astype(jnp.float32)   # (F, G_EXT)

    # Hoist Cox-de Boor knot-difference reciprocals out of the kernel (also NaN-safe).
    gmax = G_EXT - 2
    recl_list, recr_list = [], []
    for d in range(1, K_SPLINE + 1):
        dl = grid_f[:, d:-1] - grid_f[:, :-(d + 1)]
        dr = grid_f[:, d + 1:] - grid_f[:, 1:-d]
        rl = jnp.where(dl != 0, 1.0 / jnp.where(dl != 0, dl, 1.0), 0.0)
        rr = jnp.where(dr != 0, 1.0 / jnp.where(dr != 0, dr, 1.0), 0.0)
        pad = gmax - rl.shape[1]
        recl_list.append(jnp.pad(rl, ((0, 0), (0, pad))))
        recr_list.append(jnp.pad(rr, ((0, 0), (0, pad))))
    recl = jnp.stack(recl_list).astype(jnp.float32)       # (K, F, gmax)
    recr = jnp.stack(recr_list).astype(jnp.float32)       # (K, F, gmax)

    coef_ofg = coef.reshape(O, F, G).astype(jnp.float32)
    sb = scale_base.reshape(O, F).astype(jnp.float32)
    sp = scale_sp.reshape(O, F).astype(jnp.float32)
    bias_o = bias.reshape(O, 1).astype(jnp.float32)
    rw = rule_w.astype(jnp.float32)

    # Lane-dense layout: batch on the last (lane) axis, padded to a tile multiple.
    n_blocks = pl.cdiv(B, tile_b)
    Bp = n_blocks * tile_b
    x_t = jnp.pad(x.astype(jnp.float32).T, ((0, 0), (0, Bp - B)))   # (F, Bp)

    # Per-block VMEM footprint is ~0.5 KB * tile_b (all f32 intermediates), far under the
    # scoped VMEM default on v5e/v6e/v7x, so no vmem_limit_bytes override is needed.
    out_t = pl.pallas_call(
        neural_predicate_kernel,
        out_shape=jax.ShapeDtypeStruct((R, Bp), jnp.float32),
        grid=(n_blocks,),
        in_specs=[
            pl.BlockSpec((F, tile_b), lambda b: (0, b)),           # x (batch-tiled)
            pl.BlockSpec((F, G_EXT), lambda b: (0, 0)),            # grid
            pl.BlockSpec((K_SPLINE, F, gmax), lambda b: (0, 0, 0)),  # recl
            pl.BlockSpec((K_SPLINE, F, gmax), lambda b: (0, 0, 0)),  # recr
            pl.BlockSpec((O, F, G), lambda b: (0, 0, 0)),          # coef
            pl.BlockSpec((O, F), lambda b: (0, 0)),                # scale_base
            pl.BlockSpec((O, F), lambda b: (0, 0)),                # scale_sp
            pl.BlockSpec((O, 1), lambda b: (0, 0)),                # bias
            pl.BlockSpec((R, O), lambda b: (0, 0)),                # rule weights
        ],
        out_specs=pl.BlockSpec((R, tile_b), lambda b: (0, b)),     # lane-dense output
        compiler_params=pltpu.CompilerParams(
            dimension_semantics=("parallel",)),
    )(x_t, grid_f, recl, recr, coef_ofg, sb, sp, bias_o, rw)

    return out_t[:, :B].T                                          # (B, R)


def _reference(x, grid_ext, coef, scale_base, scale_sp, bias, rule_w):
    """Pure-JAX reference reproducing the per-edge pykan math (with divides)."""
    B, F = x.shape
    SIZE, G_EXT = grid_ext.shape
    O = SIZE // F
    x_t = x.T
    xe = jnp.concatenate([x_t] * O, axis=0)
    xg = xe[:, None, :]
    gg = grid_ext[:, :, None]
    basis = ((xg >= gg[:, :-1]).astype(jnp.float32) *
             (xg < gg[:, 1:]).astype(jnp.float32))
    for d in range(1, K_SPLINE + 1):
        left = (xg - gg[:, :-(d + 1)]) / (gg[:, d:-1] - gg[:, :-(d + 1)]) * basis[:, :-1]
        right = (gg[:, d + 1:] - xg) / (gg[:, d + 1:] - gg[:, 1:-d]) * basis[:, 1:]
        basis = left + right
    spline = jnp.sum(coef[:, :, None] * basis, axis=1)
    base = xe * (1.0 / (1.0 + jnp.exp(-xe)))
    y_edge = scale_base.T * base + scale_sp.T * spline
    kan = jnp.sum(y_edge.reshape(O, F, B), axis=1).T + bias
    return kan @ jax.nn.sigmoid(rule_w).T


if __name__ == "__main__":
    # Module defaults: number_features=3, number_predicates=2, number_rules=1
    B, F, O, R = 8, 3, 2, 1
    NUM, K = 5, K_SPLINE
    SIZE = O * F

    key = jax.random.PRNGKey(0)
    k_x, k_coef, k_rw = jax.random.split(key, 3)

    # Input: (batch, number_features), values inside the KAN grid range [-1, 1)
    x = jax.random.uniform(k_x, (B, F), jnp.float32, minval=-1.0, maxval=1.0)

    # KAN per-edge extended grid: linspace(-1, 1, num+1), extended by k steps each side
    base_grid = jnp.linspace(-1.0, 1.0, NUM + 1)
    h = 2.0 / NUM
    ext = jnp.concatenate([
        base_grid[0] + h * jnp.arange(-K, 0, dtype=jnp.float32),
        base_grid,
        base_grid[-1] + h * jnp.arange(1, K + 1, dtype=jnp.float32),
    ]).astype(jnp.float32)
    grid_ext = jnp.tile(ext[None, :], (SIZE, 1))                  # (SIZE, 12)

    # Deterministic synthetic parameters (shapes per pykan KANLayer / KAN bias / RuleLayer)
    coef = 0.1 * jax.random.normal(k_coef, (SIZE, NUM + K), jnp.float32)  # (SIZE, 8)
    scale_base = jnp.ones((1, SIZE), jnp.float32)
    scale_sp = jnp.ones((1, SIZE), jnp.float32)
    bias = jnp.zeros((1, O), jnp.float32)
    rule_w = jax.random.normal(k_rw, (R, O), jnp.float32)

    out = neural_predicate_forward(x, grid_ext, coef, scale_base, scale_sp, bias, rule_w,
                                   tile_b=256)
    jax.block_until_ready(out)
    assert out.shape == (B, R) and out.dtype == jnp.float32

    ref = _reference(x, grid_ext, coef, scale_base, scale_sp, bias, rule_w)
    assert jnp.allclose(out, ref, rtol=1e-4, atol=1e-4), (out, ref)

    print("KERNEL_OK")
</pallas_src>

<mosaic_0001>
module attributes {stable_mosaic.version = 11 : i64} {
  func.func @neural_predicate_kernel(%arg0: i32, %arg1: memref<3x256xf32, #tpu.memory_space<vmem>>, %arg2: memref<3x12xf32, #tpu.memory_space<vmem>>, %arg3: memref<3x3x10xf32, #tpu.memory_space<vmem>>, %arg4: memref<3x3x10xf32, #tpu.memory_space<vmem>>, %arg5: memref<2x3x8xf32, #tpu.memory_space<vmem>>, %arg6: memref<2x3xf32, #tpu.memory_space<vmem>>, %arg7: memref<2x3xf32, #tpu.memory_space<vmem>>, %arg8: memref<2x1xf32, #tpu.memory_space<vmem>>, %arg9: memref<1x2xf32, #tpu.memory_space<vmem>>, %arg10: memref<1x256xf32, #tpu.memory_space<vmem>>) attributes {dimension_semantics = [#tpu.dimension_semantics<parallel>], iteration_bounds = array<i64: 1>, scalar_prefetch = 0 : i64, scratch_operands = 0 : i64, tpu.core_type = #tpu.core_type<tc>, window_params = [{transform_indices = @transform_0, window_bounds = array<i64: 3, 256>}, {pipeline_mode = #tpu.pipeline_mode<synchronous>, transform_indices = @transform_1, window_bounds = array<i64: 3, 12>}, {pipeline_mode = #tpu.pipeline_mode<synchronous>, transform_indices = @transform_2, window_bounds = array<i64: 3, 3, 10>}, {pipeline_mode = #tpu.pipeline_mode<synchronous>, transform_indices = @transform_3, window_bounds = array<i64: 3, 3, 10>}, {pipeline_mode = #tpu.pipeline_mode<synchronous>, transform_indices = @transform_4, window_bounds = array<i64: 2, 3, 8>}, {pipeline_mode = #tpu.pipeline_mode<synchronous>, transform_indices = @transform_5, window_bounds = array<i64: 2, 3>}, {pipeline_mode = #tpu.pipeline_mode<synchronous>, transform_indices = @transform_6, window_bounds = array<i64: 2, 3>}, {pipeline_mode = #tpu.pipeline_mode<synchronous>, transform_indices = @transform_7, window_bounds = array<i64: 2, 1>}, {pipeline_mode = #tpu.pipeline_mode<synchronous>, transform_indices = @transform_8, window_bounds = array<i64: 1, 2>}, {transform_indices = @transform_9, window_bounds = array<i64: 1, 256>}]} {
    %c0 = arith.constant 0 : index
    %c0_0 = arith.constant 0 : index
    %0 = vector.load %arg1[%c0, %c0_0] : memref<3x256xf32, #tpu.memory_space<vmem>>, vector<3x256xf32>
    %c0_1 = arith.constant 0 : index
    %c0_2 = arith.constant 0 : index
    %1 = vector.load %arg2[%c0_1, %c0_2] : memref<3x12xf32, #tpu.memory_space<vmem>>, vector<3x12xf32>
    %c0_3 = arith.constant 0 : index
    %c0_4 = arith.constant 0 : index
    %c0_5 = arith.constant 0 : index
    %2 = vector.load %arg3[%c0_3, %c0_4, %c0_5] : memref<3x3x10xf32, #tpu.memory_space<vmem>>, vector<3x3x10xf32>
    %c0_6 = arith.constant 0 : index
    %c0_7 = arith.constant 0 : index
    %c0_8 = arith.constant 0 : index
    %3 = vector.load %arg4[%c0_6, %c0_7, %c0_8] : memref<3x3x10xf32, #tpu.memory_space<vmem>>, vector<3x3x10xf32>
    %c0_9 = arith.constant 0 : index
    %c0_10 = arith.constant 0 : index
    %c0_11 = arith.constant 0 : index
    %4 = vector.load %arg5[%c0_9, %c0_10, %c0_11] : memref<2x3x8xf32, #tpu.memory_space<vmem>>, vector<2x3x8xf32>
    %c0_12 = arith.constant 0 : index
    %c0_13 = arith.constant 0 : index
    %5 = vector.load %arg6[%c0_12, %c0_13] : memref<2x3xf32, #tpu.memory_space<vmem>>, vector<2x3xf32>
    %c0_14 = arith.constant 0 : index
    %c0_15 = arith.constant 0 : index
    %6 = vector.load %arg7[%c0_14, %c0_15] : memref<2x3xf32, #tpu.memory_space<vmem>>, vector<2x3xf32>
    %c0_16 = arith.constant 0 : index
    %c0_17 = arith.constant 0 : index
    %7 = vector.load %arg8[%c0_16, %c0_17] : memref<2x1xf32, #tpu.memory_space<vmem>>, vector<2x1xf32>
    %c0_18 = arith.constant 0 : index
    %c0_19 = arith.constant 0 : index
    %8 = vector.load %arg9[%c0_18, %c0_19] : memref<1x2xf32, #tpu.memory_space<vmem>>, vector<1x2xf32>
    %9 = vector.shape_cast %0 : vector<3x256xf32> to vector<3x1x256xf32>
    %10 = vector.shape_cast %1 : vector<3x12xf32> to vector<3x12x1xf32>
    %11 = vector.extract_strided_slice %10 {offsets = [0, 0, 0], sizes = [3, 11, 1], strides = [1, 1, 1]} : vector<3x12x1xf32> to vector<3x11x1xf32>
    %12 = vector.broadcast %9 : vector<3x1x256xf32> to vector<3x11x256xf32>
    %13 = vector.broadcast %11 : vector<3x11x1xf32> to vector<3x11x256xf32>
    %14 = arith.cmpf oge, %12, %13 : vector<3x11x256xf32>
    %15 = arith.extui %14 : vector<3x11x256xi1> to vector<3x11x256xi32>
    %16 = arith.sitofp %15 : vector<3x11x256xi32> to vector<3x11x256xf32>
    %17 = vector.extract_strided_slice %10 {offsets = [0, 1, 0], sizes = [3, 11, 1], strides = [1, 1, 1]} : vector<3x12x1xf32> to vector<3x11x1xf32>
    %18 = vector.broadcast %9 : vector<3x1x256xf32> to vector<3x11x256xf32>
    %19 = vector.broadcast %17 : vector<3x11x1xf32> to vector<3x11x256xf32>
    %20 = arith.cmpf olt, %18, %19 : vector<3x11x256xf32>
    %21 = arith.extui %20 : vector<3x11x256xi1> to vector<3x11x256xi32>
    %22 = arith.sitofp %21 : vector<3x11x256xi32> to vector<3x11x256xf32>
    %23 = arith.mulf %16, %22 : vector<3x11x256xf32>
    %24 = vector.extract_strided_slice %10 {offsets = [0, 0, 0], sizes = [3, 10, 1], strides = [1, 1, 1]} : vector<3x12x1xf32> to vector<3x10x1xf32>
    %25 = vector.broadcast %9 : vector<3x1x256xf32> to vector<3x10x256xf32>
    %26 = vector.broadcast %24 : vector<3x10x1xf32> to vector<3x10x256xf32>
    %27 = arith.subf %25, %26 : vector<3x10x256xf32>
    %28 = vector.extract_strided_slice %2 {offsets = [0, 0, 0], sizes = [1, 3, 10], strides = [1, 1, 1]} : vector<3x3x10xf32> to vector<1x3x10xf32>
    %29 = vector.shape_cast %28 : vector<1x3x10xf32> to vector<3x10xf32>
    %30 = vector.shape_cast %29 : vector<3x10xf32> to vector<3x10x1xf32>
    %31 = vector.broadcast %30 : vector<3x10x1xf32> to vector<3x10x256xf32>
    %32 = arith.mulf %27, %31 : vector<3x10x256xf32>
    %33 = vector.extract_strided_slice %23 {offsets = [0, 0, 0], sizes = [3, 10, 256], strides = [1, 1, 1]} : vector<3x11x256xf32> to vector<3x10x256xf32>
    %34 = arith.mulf %32, %33 : vector<3x10x256xf32>
    %35 = vector.extract_strided_slice %10 {offsets = [0, 2, 0], sizes = [3, 10, 1], strides = [1, 1, 1]} : vector<3x12x1xf32> to vector<3x10x1xf32>
    %36 = vector.broadcast %35 : vector<3x10x1xf32> to vector<3x10x256xf32>
    %37 = vector.broadcast %9 : vector<3x1x256xf32> to vector<3x10x256xf32>
    %38 = arith.subf %36, %37 : vector<3x10x256xf32>
    %39 = vector.extract_strided_slice %3 {offsets = [0, 0, 0], sizes = [1, 3, 10], strides = [1, 1, 1]} : vector<3x3x10xf32> to vector<1x3x10xf32>
    %40 = vector.shape_cast %39 : vector<1x3x10xf32> to vector<3x10xf32>
    %41 = vector.shape_cast %40 : vector<3x10xf32> to vector<3x10x1xf32>
    %42 = vector.broadcast %41 : vector<3x10x1xf32> to vector<3x10x256xf32>
    %43 = arith.mulf %38, %42 : vector<3x10x256xf32>
    %44 = vector.extract_strided_slice %23 {offsets = [0, 1, 0], sizes = [3, 10, 256], strides = [1, 1, 1]} : vector<3x11x256xf32> to vector<3x10x256xf32>
    %45 = arith.mulf %43, %44 : vector<3x10x256xf32>
    %46 = arith.addf %34, %45 : vector<3x10x256xf32>
    %47 = vector.extract_strided_slice %10 {offsets = [0, 0, 0], sizes = [3, 9, 1], strides = [1, 1, 1]} : vector<3x12x1xf32> to vector<3x9x1xf32>
    %48 = vector.broadcast %9 : vector<3x1x256xf32> to vector<3x9x256xf32>
    %49 = vector.broadcast %47 : vector<3x9x1xf32> to vector<3x9x256xf32>
    %50 = arith.subf %48, %49 : vector<3x9x256xf32>
    %51 = vector.extract_strided_slice %2 {offsets = [1, 0, 0], sizes = [1, 3, 9], strides = [1, 1, 1]} : vector<3x3x10xf32> to vector<1x3x9xf32>
    %52 = vector.shape_cast %51 : vector<1x3x9xf32> to vector<3x9xf32>
    %53 = vector.shape_cast %52 : vector<3x9xf32> to vector<3x9x1xf32>
    %54 = vector.broadcast %53 : vector<3x9x1xf32> to vector<3x9x256xf32>
    %55 = arith.mulf %50, %54 : vector<3x9x256xf32>
    %56 = vector.extract_strided_slice %46 {offsets = [0, 0, 0], sizes = [3, 9, 256], strides = [1, 1, 1]} : vector<3x10x256xf32> to vector<3x9x256xf32>
    %57 = arith.mulf %55, %56 : vector<3x9x256xf32>
    %58 = vector.extract_strided_slice %10 {offsets = [0, 3, 0], sizes = [3, 9, 1], strides = [1, 1, 1]} : vector<3x12x1xf32> to vector<3x9x1xf32>
    %59 = vector.broadcast %58 : vector<3x9x1xf32> to vector<3x9x256xf32>
    %60 = vector.broadcast %9 : vector<3x1x256xf32> to vector<3x9x256xf32>
    %61 = arith.subf %59, %60 : vector<3x9x256xf32>
    %62 = vector.extract_strided_slice %3 {offsets = [1, 0, 0], sizes = [1, 3, 9], strides = [1, 1, 1]} : vector<3x3x10xf32> to vector<1x3x9xf32>
    %63 = vector.shape_cast %62 : vector<1x3x9xf32> to vector<3x9xf32>
    %64 = vector.shape_cast %63 : vector<3x9xf32> to vector<3x9x1xf32>
    %65 = vector.broadcast %64 : vector<3x9x1xf32> to vector<3x9x256xf32>
    %66 = arith.mulf %61, %65 : vector<3x9x256xf32>
    %67 = vector.extract_strided_slice %46 {offsets = [0, 1, 0], sizes = [3, 9, 256], strides = [1, 1, 1]} : vector<3x10x256xf32> to vector<3x9x256xf32>
    %68 = arith.mulf %66, %67 : vector<3x9x256xf32>
    %69 = arith.addf %57, %68 : vector<3x9x256xf32>
    %70 = vector.extract_strided_slice %10 {offsets = [0, 0, 0], sizes = [3, 8, 1], strides = [1, 1, 1]} : vector<3x12x1xf32> to vector<3x8x1xf32>
    %71 = vector.broadcast %9 : vector<3x1x256xf32> to vector<3x8x256xf32>
    %72 = vector.broadcast %70 : vector<3x8x1xf32> to vector<3x8x256xf32>
    %73 = arith.subf %71, %72 : vector<3x8x256xf32>
    %74 = vector.extract_strided_slice %2 {offsets = [2, 0, 0], sizes = [1, 3, 8], strides = [1, 1, 1]} : vector<3x3x10xf32> to vector<1x3x8xf32>
    %75 = vector.shape_cast %74 : vector<1x3x8xf32> to vector<3x8xf32>
    %76 = vector.shape_cast %75 : vector<3x8xf32> to vector<3x8x1xf32>
    %77 = vector.broadcast %76 : vector<3x8x1xf32> to vector<3x8x256xf32>
    %78 = arith.mulf %73, %77 : vector<3x8x256xf32>
    %79 = vector.extract_strided_slice %69 {offsets = [0, 0, 0], sizes = [3, 8, 256], strides = [1, 1, 1]} : vector<3x9x256xf32> to vector<3x8x256xf32>
    %80 = arith.mulf %78, %79 : vector<3x8x256xf32>
    %81 = vector.extract_strided_slice %10 {offsets = [0, 4, 0], sizes = [3, 8, 1], strides = [1, 1, 1]} : vector<3x12x1xf32> to vector<3x8x1xf32>
    %82 = vector.broadcast %81 : vector<3x8x1xf32> to vector<3x8x256xf32>
    %83 = vector.broadcast %9 : vector<3x1x256xf32> to vector<3x8x256xf32>
    %84 = arith.subf %82, %83 : vector<3x8x256xf32>
    %85 = vector.extract_strided_slice %3 {offsets = [2, 0, 0], sizes = [1, 3, 8], strides = [1, 1, 1]} : vector<3x3x10xf32> to vector<1x3x8xf32>
    %86 = vector.shape_cast %85 : vector<1x3x8xf32> to vector<3x8xf32>
    %87 = vector.shape_cast %86 : vector<3x8xf32> to vector<3x8x1xf32>
    %88 = vector.broadcast %87 : vector<3x8x1xf32> to vector<3x8x256xf32>
    %89 = arith.mulf %84, %88 : vector<3x8x256xf32>
    %90 = vector.extract_strided_slice %69 {offsets = [0, 1, 0], sizes = [3, 8, 256], strides = [1, 1, 1]} : vector<3x9x256xf32> to vector<3x8x256xf32>
    %91 = arith.mulf %89, %90 : vector<3x8x256xf32>
    %92 = arith.addf %80, %91 : vector<3x8x256xf32>
    %93 = vector.extract_strided_slice %4 {offsets = [0, 0, 0], sizes = [2, 3, 1], strides = [1, 1, 1]} : vector<2x3x8xf32> to vector<2x3x1xf32>
    %94 = vector.shape_cast %93 : vector<2x3x1xf32> to vector<2x3xf32>
    %95 = vector.shape_cast %94 : vector<2x3xf32> to vector<2x3x1xf32>
    %96 = vector.extract_strided_slice %92 {offsets = [0, 0, 0], sizes = [3, 1, 256], strides = [1, 1, 1]} : vector<3x8x256xf32> to vector<3x1x256xf32>
    %97 = vector.shape_cast %96 : vector<3x1x256xf32> to vector<3x256xf32>
    %98 = vector.shape_cast %97 : vector<3x256xf32> to vector<1x3x256xf32>
    %99 = vector.broadcast %95 : vector<2x3x1xf32> to vector<2x3x256xf32>
    %100 = vector.broadcast %98 : vector<1x3x256xf32> to vector<2x3x256xf32>
    %101 = arith.mulf %99, %100 : vector<2x3x256xf32>
    %102 = vector.extract_strided_slice %4 {offsets = [0, 0, 1], sizes = [2, 3, 1], strides = [1, 1, 1]} : vector<2x3x8xf32> to vector<2x3x1xf32>
    %103 = vector.shape_cast %102 : vector<2x3x1xf32> to vector<2x3xf32>
    %104 = vector.shape_cast %103 : vector<2x3xf32> to vector<2x3x1xf32>
    %105 = vector.extract_strided_slice %92 {offsets = [0, 1, 0], sizes = [3, 1, 256], strides = [1, 1, 1]} : vector<3x8x256xf32> to vector<3x1x256xf32>
    %106 = vector.shape_cast %105 : vector<3x1x256xf32> to vector<3x256xf32>
    %107 = vector.shape_cast %106 : vector<3x256xf32> to vector<1x3x256xf32>
    %108 = vector.broadcast %104 : vector<2x3x1xf32> to vector<2x3x256xf32>
    %109 = vector.broadcast %107 : vector<1x3x256xf32> to vector<2x3x256xf32>
    %110 = arith.mulf %108, %109 : vector<2x3x256xf32>
    %111 = arith.addf %101, %110 : vector<2x3x256xf32>
    %112 = vector.extract_strided_slice %4 {offsets = [0, 0, 2], sizes = [2, 3, 1], strides = [1, 1, 1]} : vector<2x3x8xf32> to vector<2x3x1xf32>
    %113 = vector.shape_cast %112 : vector<2x3x1xf32> to vector<2x3xf32>
    %114 = vector.shape_cast %113 : vector<2x3xf32> to vector<2x3x1xf32>
    %115 = vector.extract_strided_slice %92 {offsets = [0, 2, 0], sizes = [3, 1, 256], strides = [1, 1, 1]} : vector<3x8x256xf32> to vector<3x1x256xf32>
    %116 = vector.shape_cast %115 : vector<3x1x256xf32> to vector<3x256xf32>
    %117 = vector.shape_cast %116 : vector<3x256xf32> to vector<1x3x256xf32>
    %118 = vector.broadcast %114 : vector<2x3x1xf32> to vector<2x3x256xf32>
    %119 = vector.broadcast %117 : vector<1x3x256xf32> to vector<2x3x256xf32>
    %120 = arith.mulf %118, %119 : vector<2x3x256xf32>
    %121 = arith.addf %111, %120 : vector<2x3x256xf32>
    %122 = vector.extract_strided_slice %4 {offsets = [0, 0, 3], sizes = [2, 3, 1], strides = [1, 1, 1]} : vector<2x3x8xf32> to vector<2x3x1xf32>
    %123 = vector.shape_cast %122 : vector<2x3x1xf32> to vector<2x3xf32>
    %124 = vector.shape_cast %123 : vector<2x3xf32> to vector<2x3x1xf32>
    %125 = vector.extract_strided_slice %92 {offsets = [0, 3, 0], sizes = [3, 1, 256], strides = [1, 1, 1]} : vector<3x8x256xf32> to vector<3x1x256xf32>
    %126 = vector.shape_cast %125 : vector<3x1x256xf32> to vector<3x256xf32>
    %127 = vector.shape_cast %126 : vector<3x256xf32> to vector<1x3x256xf32>
    %128 = vector.broadcast %124 : vector<2x3x1xf32> to vector<2x3x256xf32>
    %129 = vector.broadcast %127 : vector<1x3x256xf32> to vector<2x3x256xf32>
    %130 = arith.mulf %128, %129 : vector<2x3x256xf32>
    %131 = arith.addf %121, %130 : vector<2x3x256xf32>
    %132 = vector.extract_strided_slice %4 {offsets = [0, 0, 4], sizes = [2, 3, 1], strides = [1, 1, 1]} : vector<2x3x8xf32> to vector<2x3x1xf32>
    %133 = vector.shape_cast %132 : vector<2x3x1xf32> to vector<2x3xf32>
    %134 = vector.shape_cast %133 : vector<2x3xf32> to vector<2x3x1xf32>
    %135 = vector.extract_strided_slice %92 {offsets = [0, 4, 0], sizes = [3, 1, 256], strides = [1, 1, 1]} : vector<3x8x256xf32> to vector<3x1x256xf32>
    %136 = vector.shape_cast %135 : vector<3x1x256xf32> to vector<3x256xf32>
    %137 = vector.shape_cast %136 : vector<3x256xf32> to vector<1x3x256xf32>
    %138 = vector.broadcast %134 : vector<2x3x1xf32> to vector<2x3x256xf32>
    %139 = vector.broadcast %137 : vector<1x3x256xf32> to vector<2x3x256xf32>
    %140 = arith.mulf %138, %139 : vector<2x3x256xf32>
    %141 = arith.addf %131, %140 : vector<2x3x256xf32>
    %142 = vector.extract_strided_slice %4 {offsets = [0, 0, 5], sizes = [2, 3, 1], strides = [1, 1, 1]} : vector<2x3x8xf32> to vector<2x3x1xf32>
    %143 = vector.shape_cast %142 : vector<2x3x1xf32> to vector<2x3xf32>
    %144 = vector.shape_cast %143 : vector<2x3xf32> to vector<2x3x1xf32>
    %145 = vector.extract_strided_slice %92 {offsets = [0, 5, 0], sizes = [3, 1, 256], strides = [1, 1, 1]} : vector<3x8x256xf32> to vector<3x1x256xf32>
    %146 = vector.shape_cast %145 : vector<3x1x256xf32> to vector<3x256xf32>
    %147 = vector.shape_cast %146 : vector<3x256xf32> to vector<1x3x256xf32>
    %148 = vector.broadcast %144 : vector<2x3x1xf32> to vector<2x3x256xf32>
    %149 = vector.broadcast %147 : vector<1x3x256xf32> to vector<2x3x256xf32>
    %150 = arith.mulf %148, %149 : vector<2x3x256xf32>
    %151 = arith.addf %141, %150 : vector<2x3x256xf32>
    %152 = vector.extract_strided_slice %4 {offsets = [0, 0, 6], sizes = [2, 3, 1], strides = [1, 1, 1]} : vector<2x3x8xf32> to vector<2x3x1xf32>
    %153 = vector.shape_cast %152 : vector<2x3x1xf32> to vector<2x3xf32>
    %154 = vector.shape_cast %153 : vector<2x3xf32> to vector<2x3x1xf32>
    %155 = vector.extract_strided_slice %92 {offsets = [0, 6, 0], sizes = [3, 1, 256], strides = [1, 1, 1]} : vector<3x8x256xf32> to vector<3x1x256xf32>
    %156 = vector.shape_cast %155 : vector<3x1x256xf32> to vector<3x256xf32>
    %157 = vector.shape_cast %156 : vector<3x256xf32> to vector<1x3x256xf32>
    %158 = vector.broadcast %154 : vector<2x3x1xf32> to vector<2x3x256xf32>
    %159 = vector.broadcast %157 : vector<1x3x256xf32> to vector<2x3x256xf32>
    %160 = arith.mulf %158, %159 : vector<2x3x256xf32>
    %161 = arith.addf %151, %160 : vector<2x3x256xf32>
    %162 = vector.extract_strided_slice %4 {offsets = [0, 0, 7], sizes = [2, 3, 1], strides = [1, 1, 1]} : vector<2x3x8xf32> to vector<2x3x1xf32>
    %163 = vector.shape_cast %162 : vector<2x3x1xf32> to vector<2x3xf32>
    %164 = vector.shape_cast %163 : vector<2x3xf32> to vector<2x3x1xf32>
    %165 = vector.extract_strided_slice %92 {offsets = [0, 7, 0], sizes = [3, 1, 256], strides = [1, 1, 1]} : vector<3x8x256xf32> to vector<3x1x256xf32>
    %166 = vector.shape_cast %165 : vector<3x1x256xf32> to vector<3x256xf32>
    %167 = vector.shape_cast %166 : vector<3x256xf32> to vector<1x3x256xf32>
    %168 = vector.broadcast %164 : vector<2x3x1xf32> to vector<2x3x256xf32>
    %169 = vector.broadcast %167 : vector<1x3x256xf32> to vector<2x3x256xf32>
    %170 = arith.mulf %168, %169 : vector<2x3x256xf32>
    %171 = arith.addf %161, %170 : vector<2x3x256xf32>
    %cst = arith.constant 0.000000e+00 : f32
    %172 = vector.broadcast %cst : f32 to vector<3x256xf32>
    %173 = arith.subf %172, %0 : vector<3x256xf32>
    %174 = math.exp %173 : vector<3x256xf32>
    %cst_20 = arith.constant 1.000000e+00 : f32
    %175 = vector.broadcast %cst_20 : f32 to vector<3x256xf32>
    %176 = arith.addf %175, %174 : vector<3x256xf32>
    %cst_21 = arith.constant 1.000000e+00 : f32
    %177 = vector.broadcast %cst_21 : f32 to vector<3x256xf32>
    %178 = arith.divf %177, %176 : vector<3x256xf32>
    %179 = arith.mulf %0, %178 : vector<3x256xf32>
    %180 = vector.shape_cast %5 : vector<2x3xf32> to vector<2x3x1xf32>
    %181 = vector.shape_cast %179 : vector<3x256xf32> to vector<1x3x256xf32>
    %182 = vector.broadcast %180 : vector<2x3x1xf32> to vector<2x3x256xf32>
    %183 = vector.broadcast %181 : vector<1x3x256xf32> to vector<2x3x256xf32>
    %184 = arith.mulf %182, %183 : vector<2x3x256xf32>
    %185 = vector.shape_cast %6 : vector<2x3xf32> to vector<2x3x1xf32>
    %186 = vector.broadcast %185 : vector<2x3x1xf32> to vector<2x3x256xf32>
    %187 = arith.mulf %186, %171 : vector<2x3x256xf32>
    %188 = arith.addf %184, %187 : vector<2x3x256xf32>
    %cst_22 = arith.constant dense<0.000000e+00> : vector<2x256xf32>
    %189 = vector.multi_reduction <add>, %188, %cst_22 [1] : vector<2x3x256xf32> to vector<2x256xf32>
    %190 = vector.broadcast %7 : vector<2x1xf32> to vector<2x256xf32>
    %191 = arith.addf %189, %190 : vector<2x256xf32>
    %cst_23 = arith.constant 0.000000e+00 : f32
    %192 = vector.broadcast %cst_23 : f32 to vector<1x2xf32>
    %193 = arith.subf %192, %8 : vector<1x2xf32>
    %194 = math.exp %193 : vector<1x2xf32>
    %cst_24 = arith.constant 1.000000e+00 : f32
    %195 = vector.broadcast %cst_24 : f32 to vector<1x2xf32>
    %196 = arith.addf %195, %194 : vector<1x2xf32>
    %cst_25 = arith.constant 1.000000e+00 : f32
    %197 = vector.broadcast %cst_25 : f32 to vector<1x2xf32>
    %198 = arith.divf %197, %196 : vector<1x2xf32>
    %199 = vector.shape_cast %198 : vector<1x2xf32> to vector<1x2x1xf32>
    %200 = vector.shape_cast %191 : vector<2x256xf32> to vector<1x2x256xf32>
    %201 = vector.broadcast %199 : vector<1x2x1xf32> to vector<1x2x256xf32>
    %202 = arith.mulf %201, %200 : vector<1x2x256xf32>
    %cst_26 = arith.constant dense<0.000000e+00> : vector<1x256xf32>
    %203 = vector.multi_reduction <add>, %202, %cst_26 [1] : vector<1x2x256xf32> to vector<1x256xf32>
    %c0_27 = arith.constant 0 : index
    %c0_28 = arith.constant 0 : index
    %204 = vector.load %arg10[%c0_27, %c0_28] : memref<1x256xf32, #tpu.memory_space<vmem>>, vector<1x256xf32>
    tpu.vector_store %arg10[%c0_27, %c0_28], %203 {strides = array<i32>} : memref<1x256xf32, #tpu.memory_space<vmem>>, vector<1x256xf32>,
    return
  }
  func.func @transform_0(%arg0: i32) -> (i32, i32) {
    %c0_i32 = arith.constant 0 : i32
    %c0_i32_0 = arith.constant 0 : i32
    return %c0_i32, %arg0 : i32, i32
  }
  func.func @transform_1(%arg0: i32) -> (i32, i32) {
    %c0_i32 = arith.constant 0 : i32
    %c0_i32_0 = arith.constant 0 : i32
    %c0_i32_1 = arith.constant 0 : i32
    return %c0_i32, %c0_i32_0 : i32, i32
  }
  func.func @transform_2(%arg0: i32) -> (i32, i32, i32) {
    %c0_i32 = arith.constant 0 : i32
    %c0_i32_0 = arith.constant 0 : i32
    %c0_i32_1 = arith.constant 0 : i32
    %c0_i32_2 = arith.constant 0 : i32
    return %c0_i32, %c0_i32_0, %c0_i32_1 : i32, i32, i32
  }
  func.func @transform_3(%arg0: i32) -> (i32, i32, i32) {
    %c0_i32 = arith.constant 0 : i32
    %c0_i32_0 = arith.constant 0 : i32
    %c0_i32_1 = arith.constant 0 : i32
    %c0_i32_2 = arith.constant 0 : i32
    return %c0_i32, %c0_i32_0, %c0_i32_1 : i32, i32, i32
  }
  func.func @transform_4(%arg0: i32) -> (i32, i32, i32) {
    %c0_i32 = arith.constant 0 : i32
    %c0_i32_0 = arith.constant 0 : i32
    %c0_i32_1 = arith.constant 0 : i32
    %c0_i32_2 = arith.constant 0 : i32
    return %c0_i32, %c0_i32_0, %c0_i32_1 : i32, i32, i32
  }
  func.func @transform_5(%arg0: i32) -> (i32, i32) {
    %c0_i32 = arith.constant 0 : i32
    %c0_i32_0 = arith.constant 0 : i32
    %c0_i32_1 = arith.constant 0 : i32
    return %c0_i32, %c0_i32_0 : i32, i32
  }
  func.func @transform_6(%arg0: i32) -> (i32, i32) {
    %c0_i32 = arith.constant 0 : i32
    %c0_i32_0 = arith.constant 0 : i32
    %c0_i32_1 = arith.constant 0 : i32
    return %c0_i32, %c0_i32_0 : i32, i32
  }
  func.func @transform_7(%arg0: i32) -> (i32, i32) {
    %c0_i32 = arith.constant 0 : i32
    %c0_i32_0 = arith.constant 0 : i32
    %c0_i32_1 = arith.constant 0 : i32
    return %c0_i32, %c0_i32_0 : i32, i32
  }
  func.func @transform_8(%arg0: i32) -> (i32, i32) {
    %c0_i32 = arith.constant 0 : i32
    %c0_i32_0 = arith.constant 0 : i32
    %c0_i32_1 = arith.constant 0 : i32
    return %c0_i32, %c0_i32_0 : i32, i32
  }
  func.func @transform_9(%arg0: i32) -> (i32, i32) {
    %c0_i32 = arith.constant 0 : i32
    %c0_i32_0 = arith.constant 0 : i32
    return %c0_i32, %arg0 : i32, i32
  }
}

</mosaic_0001>

<llo_original>
// kernel: tpu_custom_call.1
$region0: #{tpu_custom_call.1}
  #allocation0 [shape = 'u32[]', space=smem, size = 0x4, offset = 0x4, fixed_abs, tag = 'smem constant byte address 0x4 - core index']
  #allocation1 [shape = 'u32[144,128]{1,0:T(1,128)}', space=vmem, size = 0x12000, scoped, tag = 'internal scratch']
  %s0 = inlined_call_operand.hbm [shape: f32[3,256], index: 0, kind: input, shape index: {}]
  %s1 = inlined_call_operand.hbm [shape: f32[3,12], index: 1, kind: input, shape index: {}]
  %s2 = inlined_call_operand.vmem [shape: f32[3,3,10], index: 2, kind: input, shape index: {}]
  %s3 = inlined_call_operand.vmem [shape: f32[3,3,10], index: 3, kind: input, shape index: {}]
  %s4 = inlined_call_operand.vmem [shape: f32[2,3,8], index: 4, kind: input, shape index: {}]
  %s5 = inlined_call_operand.vmem [shape: f32[2,3], index: 5, kind: input, shape index: {}]
  %s6 = inlined_call_operand.vmem [shape: f32[2,3], index: 6, kind: input, shape index: {}]
  %s7 = inlined_call_operand.vmem [shape: f32[2,1], index: 7, kind: input, shape index: {}]
  %s8 = inlined_call_operand.vmem [shape: f32[1,2], index: 8, kind: input, shape index: {}]
  %s9 = inlined_call_operand.hbm [shape: f32[1,256], index: 9, kind: output, shape index: {}]
  %s10 = sld [smem:[#allocation0]]
  $region54: #{tpu_custom_call.1} parent=0
    _
  %s12 = ssub.s32 1, %s10
  %s13 = scalar_select 0, %s12, %s10
  $region1: #{tpu_custom_call.1} parent=0
    #allocation2 [shape = 'u8[4096]{0}', space=vmem, size = 0x1000, scoped, tag = 'input window, operand 0, single buffered']
    #allocation3 [shape = 's32[1]{0}', space=sflag, size = 0x4, scoped, tag = 'scoped memory for tpu_custom_call.1']
    #allocation4 [shape = 's32[1]{0}', space=sflag, size = 0x4, scoped, tag = 'scoped memory for tpu_custom_call.1']
    #allocation5 [shape = 'u8[2048]{0}', space=vmem, size = 0x800, scoped, tag = 'input window, operand 1, single buffered']
    #allocation6 [shape = 's32[1]{0}', space=sflag, size = 0x4, scoped, tag = 'scoped memory for tpu_custom_call.1']
    #allocation7 [shape = 'u8[1024]{0}', space=vmem, size = 0x400, scoped, tag = 'output window, operand 0, single buffered']
    %14 = vsyncpa [#allocation3], 0
    %15 = vsyncpa [#allocation6], 0
    %16 = vsyncpa [#allocation4], 0
    // Predicated region
    $region2: #{tpu_custom_call.1} parent=1 // pred_check
      _
    $region3: #{tpu_custom_call.1} parent=1 // pred_check_branch
      %18 = sbr.rel (0) target = $region5
    $region4: #{tpu_custom_call.1} parent=1 // pred_region
      %s20 = ssub.s32 128, 128
      %21 = vsyncadd [#allocation3], %s20
      %s23 = sshll.u32 [#allocation2], 4
      %s24 = int_to_ptr.vmem [resolvable:$true] %s23
      %26 = dma.hbm_to_vmem [thread:$0]  %s0, 128, %s24, [#allocation3]
    $region5: #{tpu_custom_call.1} parent=1 // pred_fallthru
      _
    // Predicated region
    $region6: #{tpu_custom_call.1} parent=1 // pred_check
      _
    $region7: #{tpu_custom_call.1} parent=1 // pred_check_branch
      %28 = sbr.rel (0) target = $region9
    $region8: #{tpu_custom_call.1} parent=1 // pred_region
      %s30 = ssub.s32 64, 64
      %31 = vsyncadd [#allocation6], %s30
      %s33 = sshll.u32 [#allocation5], 4
      %s34 = int_to_ptr.vmem [resolvable:$true] %s33
      %36 = dma.hbm_to_vmem [thread:$0]  %s1, 64, %s34, [#allocation6]
    $region9: #{tpu_custom_call.1} parent=1 // pred_fallthru
      _
    // Predicated region
    $region10: #{tpu_custom_call.1} parent=1 // pred_check
      _
    $region11: #{tpu_custom_call.1} parent=1 // pred_check_branch
      %38 = sbr.rel (0) target = $region13
    $region12: #{tpu_custom_call.1} parent=1 // pred_region
      _
    $region13: #{tpu_custom_call.1} parent=1 // pred_fallthru
      _
    // Predicated region
    $region14: #{tpu_custom_call.1} parent=1 // pred_check
      _
    $region15: #{tpu_custom_call.1} parent=1 // pred_check_branch
      %40 = sbr.rel (0) target = $region17
    $region16: #{tpu_custom_call.1} parent=1 // pred_region
      _
    $region17: #{tpu_custom_call.1} parent=1 // pred_fallthru
      _
    // Predicated region
    $region18: #{tpu_custom_call.1} parent=1 // pred_check
      _
    $region19: #{tpu_custom_call.1} parent=1 // pred_check_branch
      %42 = sbr.rel (0) target = $region21
    $region20: #{tpu_custom_call.1} parent=1 // pred_region
      _
    $region21: #{tpu_custom_call.1} parent=1 // pred_fallthru
      _
    // Predicated region
    $region22: #{tpu_custom_call.1} parent=1 // pred_check
      _
    $region23: #{tpu_custom_call.1} parent=1 // pred_check_branch
      %44 = sbr.rel (0) target = $region25
    $region24: #{tpu_custom_call.1} parent=1 // pred_region
      _
    $region25: #{tpu_custom_call.1} parent=1 // pred_fallthru
      _
    // Predicated region
    $region26: #{tpu_custom_call.1} parent=1 // pred_check
      _
    $region27: #{tpu_custom_call.1} parent=1 // pred_check_branch
      %46 = sbr.rel (0) target = $region29
    $region28: #{tpu_custom_call.1} parent=1 // pred_region
      _
    $region29: #{tpu_custom_call.1} parent=1 // pred_fallthru
      _
    // Predicated region
    $region30: #{tpu_custom_call.1} parent=1 // pred_check
      _
    $region31: #{tpu_custom_call.1} parent=1 // pred_check_branch
      %48 = sbr.rel (0) target = $region33
    $region32: #{tpu_custom_call.1} parent=1 // pred_region
      _
    $region33: #{tpu_custom_call.1} parent=1 // pred_fallthru
      _
    // Predicated region
    $region34: #{tpu_custom_call.1} parent=1 // pred_check
      _
    $region35: #{tpu_custom_call.1} parent=1 // pred_check_branch
      %50 = sbr.rel (0) target = $region37
    $region36: #{tpu_custom_call.1} parent=1 // pred_region
      _
    $region37: #{tpu_custom_call.1} parent=1 // pred_fallthru
      _
    // Predicated region
    $region38: #{tpu_custom_call.1} parent=1 // pred_check
      _
    $region39: #{tpu_custom_call.1} parent=1 // pred_check_branch
      %52 = sbr.rel (0) target = $region41
    $region40: #{tpu_custom_call.1} parent=1 // pred_region
      %53 = dma.done [#allocation3], 128
    $region41: #{tpu_custom_call.1} parent=1 // pred_fallthru
      _
    // Predicated region
    $region42: #{tpu_custom_call.1} parent=1 // pred_check
      _
    $region43: #{tpu_custom_call.1} parent=1 // pred_check_branch
      %55 = sbr.rel (0) target = $region45
    $region44: #{tpu_custom_call.1} parent=1 // pred_region
      %56 = dma.done [#allocation6], 64
    $region45: #{tpu_custom_call.1} parent=1 // pred_fallthru
      _
    %v57 = vld [vmem:[#allocation2] sm:$0x77]
    %v58 = vld [vmem:[#allocation5] sm:$0x7]
    %v59 = vld [vmem:[%s2] sm:$0x7]
    %v60 = vld [vmem:[%s2 + $0x4] sm:$0x7]
    %v61 = vld [vmem:[%s2 + $0x8] sm:$0x7]
    %v62 = vld [vmem:[%s3] sm:$0x7]
    %v63 = vld [vmem:[%s3 + $0x4] sm:$0x7]
    %v64 = vld [vmem:[%s3 + $0x8] sm:$0x7]
    %v65 = vld [vmem:[%s4] sm:$0x7]
    %v66 = vld [vmem:[%s4 + $0x4] sm:$0x7]
    %v67 = vld [vmem:[%s5] sm:$0x3]
    %v68 = vld [vmem:[%s6] sm:$0x3]
    %v69 = vld [vmem:[%s7] sm:$0x3]
    %v70 = vld [vmem:[%s8] sm:$0x1]
    %v73 = vunpack.c.l.s4 1966171168
    %v74 = vunpack.c.0.s8 %v73
    %v75 = vlaneseq
    %v76 = vshrl.u32 %v75, 7
    %v77 = vsub.s32 %v74, %v76
    %v78 = vrot.slane %v57, %v77
    %v79 = vcombine.high %v78, %v78
    %v81 = vunpack.c.l.s4 1966171168
    %v82 = vunpack.c.0.s8 %v81
    %v83 = vlaneseq
    %v84 = vshrl.u32 %v83, 7
    %v85 = vsub.s32 %v82, %v84
    %v86 = vrot.slane %v78, %v85
    %v88 = vunpack.c.l.s4 1966171168
    %v89 = vunpack.c.0.s8 %v88
    %v90 = vlaneseq
    %v91 = vshrl.u32 %v90, 7
    %v92 = vsub.s32 %v89, %v91
    %v93 = vrot.slane %v79, %v92
    %v94 = vcombine.high %v86, %v86
    %v95 = vlaneseq
    %v96 = vshrl.u32 %v95, 7
    %v97 = vsub.s32 0, %v96
    %v98 = vrot.slane %v58, %v97
    %100 = vbcast.lane.b32.xlu0 %v98, 256
    %v101 = vpop.permute.xlu0 %100
    %s103 = sor.u32 256, 8
    %104 = vbcast.lane.b32.xlu0 %v98, %s103
    %v105 = vpop.permute.xlu0 %104
    %v106 = vlaneseq
    %v107 = vshrl.u32 %v106, 7
    %v108 = vsub.s32 1, %v107
    %v109 = vrot.slane %v58, %v108
    %111 = vbcast.lane.b32.xlu0 %v109, 256
    %v112 = vpop.permute.xlu0 %111
    %s114 = sor.u32 256, 8
    %115 = vbcast.lane.b32.xlu0 %v109, %s114
    %v116 = vpop.permute.xlu0 %115
    %v117 = vlaneseq
    %v118 = vshrl.u32 %v117, 7
    %v119 = vsub.s32 2, %v118
    %v120 = vrot.slane %v58, %v119
    %122 = vbcast.lane.b32.xlu0 %v120, 256
    %v123 = vpop.permute.xlu0 %122
    %s125 = sor.u32 256, 8
    %126 = vbcast.lane.b32.xlu0 %v120, %s125
    %v127 = vpop.permute.xlu0 %126
    %v128 = vlaneseq
    %v129 = vshrl.u32 %v128, 7
    %v130 = vsub.s32 0, %v129
    %v131 = vrot.slane %v86, %v130
    %v132 = vlaneseq
    %v133 = vshrl.u32 %v132, 7
    %v134 = vsub.s32 1, %v133
    %v135 = vrot.slane %v86, %v134
    %v136 = vlaneseq
    %v137 = vshrl.u32 %v136, 7
    %v138 = vsub.s32 0, %v137
    %v139 = vrot.slane %v93, %v138
    %v140 = vlaneseq
    %v141 = vshrl.u32 %v140, 7
    %v142 = vsub.s32 1, %v141
    %v143 = vrot.slane %v93, %v142
    %v144 = vlaneseq
    %v145 = vshrl.u32 %v144, 7
    %v146 = vsub.s32 0, %v145
    %v147 = vrot.slane %v94, %v146
    %v148 = vlaneseq
    %v149 = vshrl.u32 %v148, 7
    %v150 = vsub.s32 1, %v149
    %v151 = vrot.slane %v94, %v150
    %vm158 = vcmp.ge.f32.partialorder %v131, %v101
    %vm159 = vcmp.ge.f32.partialorder %v135, %v101
    %vm160 = vcmp.ge.f32.partialorder %v131, %v105
    %vm161 = vcmp.ge.f32.partialorder %v135, %v105
    %vm162 = vcmp.ge.f32.partialorder %v139, %v112
    %vm163 = vcmp.ge.f32.partialorder %v143, %v112
    %vm164 = vcmp.ge.f32.partialorder %v139, %v116
    %vm165 = vcmp.ge.f32.partialorder %v143, %v116
    %vm166 = vcmp.ge.f32.partialorder %v147, %v123
    %vm167 = vcmp.ge.f32.partialorder %v151, %v123
    %vm168 = vcmp.ge.f32.partialorder %v147, %v127
    %vm169 = vcmp.ge.f32.partialorder %v151, %v127
    %v170 = vsel %vm158, 1, 0
    %v171 = vsel %vm159, 1, 0
    %v172 = vsel %vm160, 1, 0
    %v173 = vsel %vm161, 1, 0
    %v174 = vsel %vm162, 1, 0
    %v175 = vsel %vm163, 1, 0
    %v176 = vsel %vm164, 1, 0
    %v177 = vsel %vm165, 1, 0
    %v178 = vsel %vm166, 1, 0
    %v179 = vsel %vm167, 1, 0
    %v180 = vsel %vm168, 1, 0
    %v181 = vsel %vm169, 1, 0
    %v182 = vcvt.s32.f32 %v170
    %v183 = vcvt.s32.f32 %v171
    %v184 = vcvt.s32.f32 %v172
    %v185 = vcvt.s32.f32 %v173
    %v186 = vcvt.s32.f32 %v174
    %v187 = vcvt.s32.f32 %v175
    %v188 = vcvt.s32.f32 %v176
    %v189 = vcvt.s32.f32 %v177
    %v190 = vcvt.s32.f32 %v178
    %v191 = vcvt.s32.f32 %v179
    %v192 = vcvt.s32.f32 %v180
    %v193 = vcvt.s32.f32 %v181
    %vm194 = vcmp.lt.f32.partialorder %v131, %v101
    %vm195 = vcmp.lt.f32.partialorder %v135, %v101
    %vm196 = vcmp.lt.f32.partialorder %v131, %v105
    %vm197 = vcmp.lt.f32.partialorder %v135, %v105
    %vm198 = vcmp.lt.f32.partialorder %v139, %v112
    %vm199 = vcmp.lt.f32.partialorder %v143, %v112
    %vm200 = vcmp.lt.f32.partialorder %v139, %v116
    %vm201 = vcmp.lt.f32.partialorder %v143, %v116
    %vm202 = vcmp.lt.f32.partialorder %v147, %v123
    %vm203 = vcmp.lt.f32.partialorder %v151, %v123
    %vm204 = vcmp.lt.f32.partialorder %v147, %v127
    %vm205 = vcmp.lt.f32.partialorder %v151, %v127
    %v206 = vsel %vm194, 1, 0
    %v207 = vsel %vm195, 1, 0
    %v208 = vsel %vm196, 1, 0
    %v209 = vsel %vm197, 1, 0
    %v210 = vsel %vm198, 1, 0
    %v211 = vsel %vm199, 1, 0
    %v212 = vsel %vm200, 1, 0
    %v213 = vsel %vm201, 1, 0
    %v214 = vsel %vm202, 1, 0
    %v215 = vsel %vm203, 1, 0
    %v216 = vsel %vm204, 1, 0
    %v217 = vsel %vm205, 1, 0
    %v218 = vcvt.s32.f32 %v206
    %v219 = vcvt.s32.f32 %v207
    %v220 = vcvt.s32.f32 %v208
    %v221 = vcvt.s32.f32 %v209
    %v222 = vcvt.s32.f32 %v210
    %v223 = vcvt.s32.f32 %v211
    %v224 = vcvt.s32.f32 %v212
    %v225 = vcvt.s32.f32 %v213
    %v226 = vcvt.s32.f32 %v214
    %v227 = vcvt.s32.f32 %v215
    %v228 = vcvt.s32.f32 %v216
    %v229 = vcvt.s32.f32 %v217
    %vm242 = vcmask 1046528
    %v243 = vrot.slane %v218, 1
    %v244 = vrot.slane %v220, 1
    %v245 = vsel %vm242, %v243, %v244
    %v246 = vrot.slane %v219, 1
    %v247 = vrot.slane %v221, 1
    %v248 = vsel %vm242, %v246, %v247
    %v249 = vrot.slane %v222, 1
    %v250 = vrot.slane %v224, 1
    %v251 = vsel %vm242, %v249, %v250
    %v252 = vrot.slane %v223, 1
    %v253 = vrot.slane %v225, 1
    %v254 = vsel %vm242, %v252, %v253
    %v255 = vrot.slane %v226, 1
    %v256 = vrot.slane %v228, 1
    %v257 = vsel %vm242, %v255, %v256
    %v258 = vrot.slane %v227, 1
    %v259 = vrot.slane %v229, 1
    %v260 = vsel %vm242, %v258, %v259
    %v273 = vmul.f32 %v182, %v245
    %v274 = vmul.f32 %v183, %v248
    %v275 = vmul.f32 %v184, %v244
    %v276 = vmul.f32 %v185, %v247
    %v277 = vmul.f32 %v186, %v251
    %v278 = vmul.f32 %v187, %v254
    %v279 = vmul.f32 %v188, %v250
    %v280 = vmul.f32 %v189, %v253
    %v281 = vmul.f32 %v190, %v257
    %v282 = vmul.f32 %v191, %v260
    %v283 = vmul.f32 %v192, %v256
    %v284 = vmul.f32 %v193, %v259
    %v285 = vsub.f32 %v131, %v101
    %v286 = vsub.f32 %v135, %v101
    %v287 = vsub.f32 %v131, %v105
    %v288 = vsub.f32 %v135, %v105
    %v289 = vsub.f32 %v139, %v112
    %v290 = vsub.f32 %v143, %v112
    %v291 = vsub.f32 %v139, %v116
    %v292 = vsub.f32 %v143, %v116
    %v293 = vsub.f32 %v147, %v123
    %v294 = vsub.f32 %v151, %v123
    %v295 = vsub.f32 %v147, %v127
    %v296 = vsub.f32 %v151, %v127
    %v297 = vlaneseq
    %v298 = vshrl.u32 %v297, 7
    %v299 = vsub.s32 0, %v298
    %v300 = vrot.slane %v59, %v299
    %302 = vbcast.lane.b32.xlu0 %v300, 256
    %v303 = vpop.permute.xlu0 %302
    %s305 = sor.u32 256, 8
    %306 = vbcast.lane.b32.xlu0 %v300, %s305
    %v307 = vpop.permute.xlu0 %306
    %v308 = vlaneseq
    %v309 = vshrl.u32 %v308, 7
    %v310 = vsub.s32 1, %v309
    %v311 = vrot.slane %v59, %v310
    %313 = vbcast.lane.b32.xlu0 %v311, 256
    %v314 = vpop.permute.xlu0 %313
    %s316 = sor.u32 256, 8
    %317 = vbcast.lane.b32.xlu0 %v311, %s316
    %v318 = vpop.permute.xlu0 %317
    %v319 = vlaneseq
    %v320 = vshrl.u32 %v319, 7
    %v321 = vsub.s32 2, %v320
    %v322 = vrot.slane %v59, %v321
    %324 = vbcast.lane.b32.xlu0 %v322, 256
    %v325 = vpop.permute.xlu0 %324
    %s327 = sor.u32 256, 8
    %328 = vbcast.lane.b32.xlu0 %v322, %s327
    %v329 = vpop.permute.xlu0 %328
    %v330 = vmul.f32 %v285, %v303
    %v331 = vmul.f32 %v286, %v303
    %v332 = vmul.f32 %v287, %v307
    %v333 = vmul.f32 %v288, %v307
    %v334 = vmul.f32 %v289, %v314
    %v335 = vmul.f32 %v290, %v314
    %v336 = vmul.f32 %v291, %v318
    %v337 = vmul.f32 %v292, %v318
    %v338 = vmul.f32 %v293, %v325
    %v339 = vmul.f32 %v294, %v325
    %v340 = vmul.f32 %v295, %v329
    %v341 = vmul.f32 %v296, %v329
    %v342 = vmul.f32 %v330, %v273
    %v343 = vmul.f32 %v331, %v274
    %v344 = vmul.f32 %v332, %v275
    %v345 = vmul.f32 %v333, %v276
    %v346 = vmul.f32 %v334, %v277
    %v347 = vmul.f32 %v335, %v278
    %v348 = vmul.f32 %v336, %v279
    %v349 = vmul.f32 %v337, %v280
    %v350 = vmul.f32 %v338, %v281
    %v351 = vmul.f32 %v339, %v282
    %v352 = vmul.f32 %v340, %v283
    %v353 = vmul.f32 %v341, %v284
    %v354 = vsub.f32 %v101, %v131
    %v355 = vsub.f32 %v101, %v135
    %v356 = vsub.f32 %v105, %v131
    %v357 = vsub.f32 %v105, %v135
    %v358 = vsub.f32 %v112, %v139
    %v359 = vsub.f32 %v112, %v143
    %v360 = vsub.f32 %v116, %v139
    %v361 = vsub.f32 %v116, %v143
    %v362 = vsub.f32 %v123, %v147
    %v363 = vsub.f32 %v123, %v151
    %v364 = vsub.f32 %v127, %v147
    %v365 = vsub.f32 %v127, %v151
    %v366 = vlaneseq
    %v367 = vshrl.u32 %v366, 7
    %v368 = vsub.s32 0, %v367
    %v369 = vrot.slane %v62, %v368
    %371 = vbcast.lane.b32.xlu0 %v369, 256
    %v372 = vpop.permute.xlu0 %371
    %s374 = sor.u32 256, 8
    %375 = vbcast.lane.b32.xlu0 %v369, %s374
    %v376 = vpop.permute.xlu0 %375
    %v377 = vlaneseq
    %v378 = vshrl.u32 %v377, 7
    %v379 = vsub.s32 1, %v378
    %v380 = vrot.slane %v62, %v379
    %382 = vbcast.lane.b32.xlu0 %v380, 256
    %v383 = vpop.permute.xlu0 %382
    %s385 = sor.u32 256, 8
    %386 = vbcast.lane.b32.xlu0 %v380, %s385
    %v387 = vpop.permute.xlu0 %386
    %v388 = vlaneseq
    %v389 = vshrl.u32 %v388, 7
    %v390 = vsub.s32 2, %v389
    %v391 = vrot.slane %v62, %v390
    %393 = vbcast.lane.b32.xlu0 %v391, 256
    %v394 = vpop.permute.xlu0 %393
    %s396 = sor.u32 256, 8
    %397 = vbcast.lane.b32.xlu0 %v391, %s396
    %v398 = vpop.permute.xlu0 %397
    %vm405 = vcmask 1041408
    %v406 = vrot.slane %v372, 6
    %v407 = vrot.slane %v376, 6
    %v408 = vsel %vm405, %v406, %v407
    %v409 = vrot.slane %v383, 6
    %v410 = vrot.slane %v387, 6
    %v411 = vsel %vm405, %v409, %v410
    %v412 = vrot.slane %v394, 6
    %v413 = vrot.slane %v398, 6
    %v414 = vsel %vm405, %v412, %v413
    %v421 = vmul.f32 %v354, %v406
    %v422 = vmul.f32 %v355, %v406
    %v423 = vmul.f32 %v356, %v408
    %v424 = vmul.f32 %v357, %v408
    %v425 = vmul.f32 %v358, %v409
    %v426 = vmul.f32 %v359, %v409
    %v427 = vmul.f32 %v360, %v411
    %v428 = vmul.f32 %v361, %v411
    %v429 = vmul.f32 %v362, %v412
    %v430 = vmul.f32 %v363, %v412
    %v431 = vmul.f32 %v364, %v414
    %v432 = vmul.f32 %v365, %v414
    %vm445 = vcmask 1040384
    %v446 = vrot.slane %v273, 7
    %v447 = vrot.slane %v274, 7
    %v448 = vrot.slane %v275, 7
    %v449 = vsel %vm445, %v446, %v448
    %v450 = vrot.slane %v276, 7
    %v451 = vsel %vm445, %v447, %v450
    %v452 = vrot.slane %v277, 7
    %v453 = vrot.slane %v278, 7
    %v454 = vrot.slane %v279, 7
    %v455 = vsel %vm445, %v452, %v454
    %v456 = vrot.slane %v280, 7
    %v457 = vsel %vm445, %v453, %v456
    %v458 = vrot.slane %v281, 7
    %v459 = vrot.slane %v282, 7
    %v460 = vrot.slane %v283, 7
    %v461 = vsel %vm445, %v458, %v460
    %v462 = vrot.slane %v284, 7
    %v463 = vsel %vm445, %v459, %v462
    %v476 = vmul.f32 %v421, %v446
    %v477 = vmul.f32 %v422, %v447
    %v478 = vmul.f32 %v423, %v449
    %v479 = vmul.f32 %v424, %v451
    %v480 = vmul.f32 %v425, %v452
    %v481 = vmul.f32 %v426, %v453
    %v482 = vmul.f32 %v427, %v455
    %v483 = vmul.f32 %v428, %v457
    %v484 = vmul.f32 %v429, %v458
    %v485 = vmul.f32 %v430, %v459
    %v486 = vmul.f32 %v431, %v461
    %v487 = vmul.f32 %v432, %v463
    %vm500 = vcmask 1045504
    %v501 = vrot.slane %v476, 2
    %v502 = vrot.slane %v478, 2
    %v503 = vsel %vm500, %v501, %v502
    %v504 = vrot.slane %v477, 2
    %v505 = vrot.slane %v479, 2
    %v506 = vsel %vm500, %v504, %v505
    %v507 = vrot.slane %v480, 2
    %v508 = vrot.slane %v482, 2
    %v509 = vsel %vm500, %v507, %v508
    %v510 = vrot.slane %v481, 2
    %v511 = vrot.slane %v483, 2
    %v512 = vsel %vm500, %v510, %v511
    %v513 = vrot.slane %v484, 2
    %v514 = vrot.slane %v486, 2
    %v515 = vsel %vm500, %v513, %v514
    %v516 = vrot.slane %v485, 2
    %v517 = vrot.slane %v487, 2
    %v518 = vsel %vm500, %v516, %v517
    %v531 = vadd.f32 %v342, %v503
    %v532 = vadd.f32 %v343, %v506
    %v533 = vadd.f32 %v344, %v502
    %v534 = vadd.f32 %v345, %v505
    %v535 = vadd.f32 %v346, %v509
    %v536 = vadd.f32 %v347, %v512
    %v537 = vadd.f32 %v348, %v508
    %v538 = vadd.f32 %v349, %v511
    %v539 = vadd.f32 %v350, %v515
    %v540 = vadd.f32 %v351, %v518
    %v541 = vadd.f32 %v352, %v514
    %v542 = vadd.f32 %v353, %v517
    %v543 = vlaneseq
    %v544 = vshrl.u32 %v543, 7
    %v545 = vsub.s32 0, %v544
    %v546 = vrot.slane %v60, %v545
    %548 = vbcast.lane.b32.xlu0 %v546, 256
    %v549 = vpop.permute.xlu0 %548
    %s551 = sor.u32 256, 8
    %552 = vbcast.lane.b32.xlu0 %v546, %s551
    %v553 = vpop.permute.xlu0 %552
    %v554 = vlaneseq
    %v555 = vshrl.u32 %v554, 7
    %v556 = vsub.s32 1, %v555
    %v557 = vrot.slane %v60, %v556
    %559 = vbcast.lane.b32.xlu0 %v557, 256
    %v560 = vpop.permute.xlu0 %559
    %s562 = sor.u32 256, 8
    %563 = vbcast.lane.b32.xlu0 %v557, %s562
    %v564 = vpop.permute.xlu0 %563
    %v565 = vlaneseq
    %v566 = vshrl.u32 %v565, 7
    %v567 = vsub.s32 2, %v566
    %v568 = vrot.slane %v60, %v567
    %570 = vbcast.lane.b32.xlu0 %v568, 256
    %v571 = vpop.permute.xlu0 %570
    %s573 = sor.u32 256, 8
    %574 = vbcast.lane.b32.xlu0 %v568, %s573
    %v575 = vpop.permute.xlu0 %574
    %v576 = vmul.f32 %v285, %v549
    %v577 = vmul.f32 %v286, %v549
    %v578 = vmul.f32 %v287, %v553
    %v579 = vmul.f32 %v288, %v553
    %v580 = vmul.f32 %v289, %v560
    %v581 = vmul.f32 %v290, %v560
    %v582 = vmul.f32 %v291, %v564
    %v583 = vmul.f32 %v292, %v564
    %v584 = vmul.f32 %v293, %v571
    %v585 = vmul.f32 %v294, %v571
    %v586 = vmul.f32 %v295, %v575
    %v587 = vmul.f32 %v296, %v575
    %v588 = vmul.f32 %v576, %v531
    %v589 = vmul.f32 %v577, %v532
    %v590 = vmul.f32 %v578, %v533
    %v591 = vmul.f32 %v579, %v534
    %v592 = vmul.f32 %v580, %v535
    %v593 = vmul.f32 %v581, %v536
    %v594 = vmul.f32 %v582, %v537
    %v595 = vmul.f32 %v583, %v538
    %v596 = vmul.f32 %v584, %v539
    %v597 = vmul.f32 %v585, %v540
    %v598 = vmul.f32 %v586, %v541
    %v599 = vmul.f32 %v587, %v542
    %v600 = vlaneseq
    %v601 = vshrl.u32 %v600, 7
    %v602 = vsub.s32 0, %v601
    %v603 = vrot.slane %v63, %v602
    %605 = vbcast.lane.b32.xlu0 %v603, 256
    %v606 = vpop.permute.xlu0 %605
    %s608 = sor.u32 256, 8
    %609 = vbcast.lane.b32.xlu0 %v603, %s608
    %v610 = vpop.permute.xlu0 %609
    %v611 = vlaneseq
    %v612 = vshrl.u32 %v611, 7
    %v613 = vsub.s32 1, %v612
    %v614 = vrot.slane %v63, %v613
    %616 = vbcast.lane.b32.xlu0 %v614, 256
    %v617 = vpop.permute.xlu0 %616
    %s619 = sor.u32 256, 8
    %620 = vbcast.lane.b32.xlu0 %v614, %s619
    %v621 = vpop.permute.xlu0 %620
    %v622 = vlaneseq
    %v623 = vshrl.u32 %v622, 7
    %v624 = vsub.s32 2, %v623
    %v625 = vrot.slane %v63, %v624
    %627 = vbcast.lane.b32.xlu0 %v625, 256
    %v628 = vpop.permute.xlu0 %627
    %s630 = sor.u32 256, 8
    %631 = vbcast.lane.b32.xlu0 %v625, %s630
    %v632 = vpop.permute.xlu0 %631
    %vm639 = vcmask 1042432
    %v640 = vrot.slane %v606, 5
    %v641 = vrot.slane %v610, 5
    %v642 = vsel %vm639, %v640, %v641
    %v643 = vrot.slane %v617, 5
    %v644 = vrot.slane %v621, 5
    %v645 = vsel %vm639, %v643, %v644
    %v646 = vrot.slane %v628, 5
    %v647 = vrot.slane %v632, 5
    %v648 = vsel %vm639, %v646, %v647
    %v655 = vmul.f32 %v354, %v640
    %v656 = vmul.f32 %v355, %v640
    %v657 = vmul.f32 %v356, %v642
    %v658 = vmul.f32 %v357, %v642
    %v659 = vmul.f32 %v358, %v643
    %v660 = vmul.f32 %v359, %v643
    %v661 = vmul.f32 %v360, %v645
    %v662 = vmul.f32 %v361, %v645
    %v663 = vmul.f32 %v362, %v646
    %v664 = vmul.f32 %v363, %v646
    %v665 = vmul.f32 %v364, %v648
    %v666 = vmul.f32 %v365, %v648
    %v679 = vrot.slane %v531, 6
    %v680 = vrot.slane %v532, 6
    %v681 = vrot.slane %v533, 6
    %v682 = vsel %vm405, %v679, %v681
    %v683 = vrot.slane %v534, 6
    %v684 = vsel %vm405, %v680, %v683
    %v685 = vrot.slane %v535, 6
    %v686 = vrot.slane %v536, 6
    %v687 = vrot.slane %v537, 6
    %v688 = vsel %vm405, %v685, %v687
    %v689 = vrot.slane %v538, 6
    %v690 = vsel %vm405, %v686, %v689
    %v691 = vrot.slane %v539, 6
    %v692 = vrot.slane %v540, 6
    %v693 = vrot.slane %v541, 6
    %v694 = vsel %vm405, %v691, %v693
    %v695 = vrot.slane %v542, 6
    %v696 = vsel %vm405, %v692, %v695
    %v709 = vmul.f32 %v655, %v679
    %v710 = vmul.f32 %v656, %v680
    %v711 = vmul.f32 %v657, %v682
    %v712 = vmul.f32 %v658, %v684
    %v713 = vmul.f32 %v659, %v685
    %v714 = vmul.f32 %v660, %v686
    %v715 = vmul.f32 %v661, %v688
    %v716 = vmul.f32 %v662, %v690
    %v717 = vmul.f32 %v663, %v691
    %v718 = vmul.f32 %v664, %v692
    %v719 = vmul.f32 %v665, %v694
    %v720 = vmul.f32 %v666, %v696
    %vm733 = vcmask 1044480
    %v734 = vrot.slane %v709, 3
    %v735 = vrot.slane %v711, 3
    %v736 = vsel %vm733, %v734, %v735
    %v737 = vrot.slane %v710, 3
    %v738 = vrot.slane %v712, 3
    %v739 = vsel %vm733, %v737, %v738
    %v740 = vrot.slane %v713, 3
    %v741 = vrot.slane %v715, 3
    %v742 = vsel %vm733, %v740, %v741
    %v743 = vrot.slane %v714, 3
    %v744 = vrot.slane %v716, 3
    %v745 = vsel %vm733, %v743, %v744
    %v746 = vrot.slane %v717, 3
    %v747 = vrot.slane %v719, 3
    %v748 = vsel %vm733, %v746, %v747
    %v749 = vrot.slane %v718, 3
    %v750 = vrot.slane %v720, 3
    %v751 = vsel %vm733, %v749, %v750
    %v764 = vadd.f32 %v588, %v736
    %v765 = vadd.f32 %v589, %v739
    %v766 = vadd.f32 %v590, %v735
    %v767 = vadd.f32 %v591, %v738
    %v768 = vadd.f32 %v592, %v742
    %v769 = vadd.f32 %v593, %v745
    %v770 = vadd.f32 %v594, %v741
    %v771 = vadd.f32 %v595, %v744
    %v772 = vadd.f32 %v596, %v748
    %v773 = vadd.f32 %v597, %v751
    %v774 = vadd.f32 %v598, %v747
    %v775 = vadd.f32 %v599, %v750
    %v776 = vlaneseq
    %v777 = vshrl.u32 %v776, 7
    %v778 = vsub.s32 0, %v777
    %v779 = vrot.slane %v61, %v778
    %781 = vbcast.lane.b32.xlu0 %v779, 256
    %v782 = vpop.permute.xlu0 %781
    %v783 = vlaneseq
    %v784 = vshrl.u32 %v783, 7
    %v785 = vsub.s32 1, %v784
    %v786 = vrot.slane %v61, %v785
    %788 = vbcast.lane.b32.xlu0 %v786, 256
    %v789 = vpop.permute.xlu0 %788
    %v790 = vlaneseq
    %v791 = vshrl.u32 %v790, 7
    %v792 = vsub.s32 2, %v791
    %v793 = vrot.slane %v61, %v792
    %795 = vbcast.lane.b32.xlu0 %v793, 256
    %v796 = vpop.permute.xlu0 %795
    %v797 = vmul.f32 %v285, %v782
    %v798 = vmul.f32 %v286, %v782
    %v799 = vmul.f32 %v289, %v789
    %v800 = vmul.f32 %v290, %v789
    %v801 = vmul.f32 %v293, %v796
    %v802 = vmul.f32 %v294, %v796
    %v803 = vmul.f32 %v797, %v764
    %v804 = vmul.f32 %v798, %v765
    %v805 = vmul.f32 %v799, %v768
    %v806 = vmul.f32 %v800, %v769
    %v807 = vmul.f32 %v801, %v772
    %v808 = vmul.f32 %v802, %v773
    %v809 = vlaneseq
    %v810 = vshrl.u32 %v809, 7
    %v811 = vsub.s32 0, %v810
    %v812 = vrot.slane %v64, %v811
    %814 = vbcast.lane.b32.xlu0 %v812, 256
    %v815 = vpop.permute.xlu0 %814
    %v816 = vlaneseq
    %v817 = vshrl.u32 %v816, 7
    %v818 = vsub.s32 1, %v817
    %v819 = vrot.slane %v64, %v818
    %821 = vbcast.lane.b32.xlu0 %v819, 256
    %v822 = vpop.permute.xlu0 %821
    %v823 = vlaneseq
    %v824 = vshrl.u32 %v823, 7
    %v825 = vsub.s32 2, %v824
    %v826 = vrot.slane %v64, %v825
    %828 = vbcast.lane.b32.xlu0 %v826, 256
    %v829 = vpop.permute.xlu0 %828
    %v833 = vrot.slane %v815, 4
    %v834 = vrot.slane %v822, 4
    %v835 = vrot.slane %v829, 4
    %v839 = vmul.f32 %v354, %v833
    %v840 = vmul.f32 %v355, %v833
    %v841 = vmul.f32 %v356, %v833
    %v842 = vmul.f32 %v357, %v833
    %v843 = vmul.f32 %v358, %v834
    %v844 = vmul.f32 %v359, %v834
    %v845 = vmul.f32 %v360, %v834
    %v846 = vmul.f32 %v361, %v834
    %v847 = vmul.f32 %v362, %v835
    %v848 = vmul.f32 %v363, %v835
    %v849 = vmul.f32 %v364, %v835
    %v850 = vmul.f32 %v365, %v835
    %v863 = vrot.slane %v764, 5
    %v864 = vrot.slane %v765, 5
    %v865 = vrot.slane %v766, 5
    %v866 = vsel %vm639, %v863, %v865
    %v867 = vrot.slane %v767, 5
    %v868 = vsel %vm639, %v864, %v867
    %v869 = vrot.slane %v768, 5
    %v870 = vrot.slane %v769, 5
    %v871 = vrot.slane %v770, 5
    %v872 = vsel %vm639, %v869, %v871
    %v873 = vrot.slane %v771, 5
    %v874 = vsel %vm639, %v870, %v873
    %v875 = vrot.slane %v772, 5
    %v876 = vrot.slane %v773, 5
    %v877 = vrot.slane %v774, 5
    %v878 = vsel %vm639, %v875, %v877
    %v879 = vrot.slane %v775, 5
    %v880 = vsel %vm639, %v876, %v879
    %v893 = vmul.f32 %v839, %v863
    %v894 = vmul.f32 %v840, %v864
    %v895 = vmul.f32 %v841, %v866
    %v896 = vmul.f32 %v842, %v868
    %v897 = vmul.f32 %v843, %v869
    %v898 = vmul.f32 %v844, %v870
    %v899 = vmul.f32 %v845, %v872
    %v900 = vmul.f32 %v846, %v874
    %v901 = vmul.f32 %v847, %v875
    %v902 = vmul.f32 %v848, %v876
    %v903 = vmul.f32 %v849, %v878
    %v904 = vmul.f32 %v850, %v880
    %vm917 = vcmask 1043456
    %v918 = vrot.slane %v893, 4
    %v919 = vrot.slane %v895, 4
    %v920 = vsel %vm917, %v918, %v919
    %v921 = vrot.slane %v894, 4
    %v922 = vrot.slane %v896, 4
    %v923 = vsel %vm917, %v921, %v922
    %v924 = vrot.slane %v897, 4
    %v925 = vrot.slane %v899, 4
    %v926 = vsel %vm917, %v924, %v925
    %v927 = vrot.slane %v898, 4
    %v928 = vrot.slane %v900, 4
    %v929 = vsel %vm917, %v927, %v928
    %v930 = vrot.slane %v901, 4
    %v931 = vrot.slane %v903, 4
    %v932 = vsel %vm917, %v930, %v931
    %v933 = vrot.slane %v902, 4
    %v934 = vrot.slane %v904, 4
    %v935 = vsel %vm917, %v933, %v934
    %v942 = vadd.f32 %v803, %v920
    %v943 = vadd.f32 %v804, %v923
    %v944 = vadd.f32 %v805, %v926
    %v945 = vadd.f32 %v806, %v929
    %v946 = vadd.f32 %v807, %v932
    %v947 = vadd.f32 %v808, %v935
    %949 = vset.pattern.permute.xlu0 0
    %950 = vperm.xlu0 %949, %v65
    %v951 = vpop.permute.xlu0 %950
    %954 = vset.pattern.permute.xlu0 0
    %955 = vperm.xlu0 %954, %v66
    %v956 = vpop.permute.xlu0 %955
    %v964 = vrot.slane %v944, 7
    %vm965 = vcmask 1041409
    %v966 = vsel %vm965, %v964, %v942
    %v967 = vrot.slane %v946, 6
    %vm968 = vcmask 1042434
    %v969 = vsel %vm968, %v967, %v966
    %v970 = vrot.slane %v945, 7
    %v971 = vsel %vm965, %v970, %v943
    %v972 = vrot.slane %v947, 6
    %v973 = vsel %vm968, %v972, %v971
    %v976 = vmul.f32 %v951, %v969
    %v977 = vmul.f32 %v951, %v973
    %v978 = vmul.f32 %v956, %v969
    %v979 = vmul.f32 %v956, %v973
    %980 = vset.pattern.permute.xlu0 1
    %981 = vperm.xlu0 %980, %v65
    %v982 = vpop.permute.xlu0 %981
    %984 = vset.pattern.permute.xlu0 1
    %985 = vperm.xlu0 %984, %v66
    %v986 = vpop.permute.xlu0 %985
    %v988 = vrot.slane %v942, 1
    %v989 = vsel %vm965, %v944, %v988
    %v990 = vrot.slane %v946, 7
    %v991 = vsel %vm968, %v990, %v989
    %v992 = vrot.slane %v943, 1
    %v993 = vsel %vm965, %v945, %v992
    %v994 = vrot.slane %v947, 7
    %v995 = vsel %vm968, %v994, %v993
    %v998 = vmul.f32 %v982, %v991
    %v999 = vmul.f32 %v982, %v995
    %v1000 = vmul.f32 %v986, %v991
    %v1001 = vmul.f32 %v986, %v995
    %v1002 = vadd.f32 %v976, %v998
    %v1003 = vadd.f32 %v977, %v999
    %v1004 = vadd.f32 %v978, %v1000
    %v1005 = vadd.f32 %v979, %v1001
    %1006 = vset.pattern.permute.xlu0 2
    %1007 = vperm.xlu0 %1006, %v65
    %v1008 = vpop.permute.xlu0 %1007
    %1010 = vset.pattern.permute.xlu0 2
    %1011 = vperm.xlu0 %1010, %v66
    %v1012 = vpop.permute.xlu0 %1011
    %v1014 = vrot.slane %v942, 2
    %v1015 = vrot.slane %v944, 1
    %v1016 = vsel %vm965, %v1015, %v1014
    %v1017 = vsel %vm968, %v946, %v1016
    %v1018 = vrot.slane %v943, 2
    %v1019 = vrot.slane %v945, 1
    %v1020 = vsel %vm965, %v1019, %v1018
    %v1021 = vsel %vm968, %v947, %v1020
    %v1024 = vmul.f32 %v1008, %v1017
    %v1025 = vmul.f32 %v1008, %v1021
    %v1026 = vmul.f32 %v1012, %v1017
    %v1027 = vmul.f32 %v1012, %v1021
    %v1028 = vadd.f32 %v1002, %v1024
    %v1029 = vadd.f32 %v1003, %v1025
    %v1030 = vadd.f32 %v1004, %v1026
    %v1031 = vadd.f32 %v1005, %v1027
    %1032 = vset.pattern.permute.xlu0 3
    %1033 = vperm.xlu0 %1032, %v65
    %v1034 = vpop.permute.xlu0 %1033
    %1036 = vset.pattern.permute.xlu0 3
    %1037 = vperm.xlu0 %1036, %v66
    %v1038 = vpop.permute.xlu0 %1037
    %v1040 = vrot.slane %v942, 3
    %v1041 = vrot.slane %v944, 2
    %v1042 = vsel %vm965, %v1041, %v1040
    %v1043 = vrot.slane %v946, 1
    %v1044 = vsel %vm968, %v1043, %v1042
    %v1045 = vrot.slane %v943, 3
    %v1046 = vrot.slane %v945, 2
    %v1047 = vsel %vm965, %v1046, %v1045
    %v1048 = vrot.slane %v947, 1
    %v1049 = vsel %vm968, %v1048, %v1047
    %v1052 = vmul.f32 %v1034, %v1044
    %v1053 = vmul.f32 %v1034, %v1049
    %v1054 = vmul.f32 %v1038, %v1044
    %v1055 = vmul.f32 %v1038, %v1049
    %v1056 = vadd.f32 %v1028, %v1052
    %v1057 = vadd.f32 %v1029, %v1053
    %v1058 = vadd.f32 %v1030, %v1054
    %v1059 = vadd.f32 %v1031, %v1055
    %1060 = vset.pattern.permute.xlu0 4
    %1061 = vperm.xlu0 %1060, %v65
    %v1062 = vpop.permute.xlu0 %1061
    %1064 = vset.pattern.permute.xlu0 4
    %1065 = vperm.xlu0 %1064, %v66
    %v1066 = vpop.permute.xlu0 %1065
    %v1068 = vrot.slane %v942, 4
    %v1069 = vrot.slane %v944, 3
    %v1070 = vsel %vm965, %v1069, %v1068
    %v1071 = vrot.slane %v946, 2
    %v1072 = vsel %vm968, %v1071, %v1070
    %v1073 = vrot.slane %v943, 4
    %v1074 = vrot.slane %v945, 3
    %v1075 = vsel %vm965, %v1074, %v1073
    %v1076 = vrot.slane %v947, 2
    %v1077 = vsel %vm968, %v1076, %v1075
    %v1080 = vmul.f32 %v1062, %v1072
    %v1081 = vmul.f32 %v1062, %v1077
    %v1082 = vmul.f32 %v1066, %v1072
    %v1083 = vmul.f32 %v1066, %v1077
    %v1084 = vadd.f32 %v1056, %v1080
    %v1085 = vadd.f32 %v1057, %v1081
    %v1086 = vadd.f32 %v1058, %v1082
    %v1087 = vadd.f32 %v1059, %v1083
    %1088 = vset.pattern.permute.xlu0 5
    %1089 = vperm.xlu0 %1088, %v65
    %v1090 = vpop.permute.xlu0 %1089
    %1092 = vset.pattern.permute.xlu0 5
    %1093 = vperm.xlu0 %1092, %v66
    %v1094 = vpop.permute.xlu0 %1093
    %v1096 = vrot.slane %v942, 5
    %v1097 = vrot.slane %v944, 4
    %v1098 = vsel %vm965, %v1097, %v1096
    %v1099 = vrot.slane %v946, 3
    %v1100 = vsel %vm968, %v1099, %v1098
    %v1101 = vrot.slane %v943, 5
    %v1102 = vrot.slane %v945, 4
    %v1103 = vsel %vm965, %v1102, %v1101
    %v1104 = vrot.slane %v947, 3
    %v1105 = vsel %vm968, %v1104, %v1103
    %v1108 = vmul.f32 %v1090, %v1100
    %v1109 = vmul.f32 %v1090, %v1105
    %v1110 = vmul.f32 %v1094, %v1100
    %v1111 = vmul.f32 %v1094, %v1105
    %v1112 = vadd.f32 %v1084, %v1108
    %v1113 = vadd.f32 %v1085, %v1109
    %v1114 = vadd.f32 %v1086, %v1110
    %v1115 = vadd.f32 %v1087, %v1111
    %1116 = vset.pattern.permute.xlu0 6
    %1117 = vperm.xlu0 %1116, %v65
    %v1118 = vpop.permute.xlu0 %1117
    %1120 = vset.pattern.permute.xlu0 6
    %1121 = vperm.xlu0 %1120, %v66
    %v1122 = vpop.permute.xlu0 %1121
    %v1124 = vrot.slane %v942, 6
    %v1125 = vrot.slane %v944, 5
    %v1126 = vsel %vm965, %v1125, %v1124
    %v1127 = vrot.slane %v946, 4
    %v1128 = vsel %vm968, %v1127, %v1126
    %v1129 = vrot.slane %v943, 6
    %v1130 = vrot.slane %v945, 5
    %v1131 = vsel %vm965, %v1130, %v1129
    %v1132 = vrot.slane %v947, 4
    %v1133 = vsel %vm968, %v1132, %v1131
    %v1136 = vmul.f32 %v1118, %v1128
    %v1137 = vmul.f32 %v1118, %v1133
    %v1138 = vmul.f32 %v1122, %v1128
    %v1139 = vmul.f32 %v1122, %v1133
    %v1140 = vadd.f32 %v1112, %v1136
    %v1141 = vadd.f32 %v1113, %v1137
    %v1142 = vadd.f32 %v1114, %v1138
    %v1143 = vadd.f32 %v1115, %v1139
    %1144 = vset.pattern.permute.xlu0 7
    %1145 = vperm.xlu0 %1144, %v65
    %v1146 = vpop.permute.xlu0 %1145
    %1148 = vset.pattern.permute.xlu0 7
    %1149 = vperm.xlu0 %1148, %v66
    %v1150 = vpop.permute.xlu0 %1149
    %v1152 = vrot.slane %v942, 7
    %v1153 = vrot.slane %v944, 6
    %v1154 = vsel %vm965, %v1153, %v1152
    %v1155 = vrot.slane %v946, 5
    %v1156 = vsel %vm968, %v1155, %v1154
    %v1157 = vrot.slane %v943, 7
    %v1158 = vrot.slane %v945, 6
    %v1159 = vsel %vm965, %v1158, %v1157
    %v1160 = vrot.slane %v947, 5
    %v1161 = vsel %vm968, %v1160, %v1159
    %v1164 = vmul.f32 %v1146, %v1156
    %v1165 = vmul.f32 %v1146, %v1161
    %v1166 = vmul.f32 %v1150, %v1156
    %v1167 = vmul.f32 %v1150, %v1161
    %v1168 = vadd.f32 %v1140, %v1164
    %v1169 = vadd.f32 %v1141, %v1165
    %v1170 = vadd.f32 %v1142, %v1166
    %v1171 = vadd.f32 %v1143, %v1167
    %v1172 = vsub.f32 0.0, %v57
    %v1173 = vmul.f32 %v1172, 1.442695
    %v1174 = vpow.pop %v1173
    %v1175 = vadd.f32 %v1174, 1.0
    %v1176 = vrcp.pop %v1175
    %v1177 = vmul.f32 1.0, %v1176
    %v1178 = vmul.f32 %v57, %v1177
    %v1179 = vlaneseq
    %v1180 = vshrl.u32 %v1179, 7
    %v1181 = vsub.s32 0, %v1180
    %v1182 = vrot.slane %v67, %v1181
    %1184 = vbcast.lane.b32.xlu0 %v1182, 256
    %v1185 = vpop.permute.xlu0 %1184
    %v1186 = vlaneseq
    %v1187 = vshrl.u32 %v1186, 7
    %v1188 = vsub.s32 1, %v1187
    %v1189 = vrot.slane %v67, %v1188
    %1191 = vbcast.lane.b32.xlu0 %v1189, 256
    %v1192 = vpop.permute.xlu0 %1191
    %v1194 = vcombine.high %v1178, %v1178
    %v1196 = vmul.f32 %v1185, %v1178
    %v1197 = vmul.f32 %v1185, %v1194
    %v1198 = vmul.f32 %v1192, %v1178
    %v1199 = vmul.f32 %v1192, %v1194
    %v1200 = vlaneseq
    %v1201 = vshrl.u32 %v1200, 7
    %v1202 = vsub.s32 0, %v1201
    %v1203 = vrot.slane %v68, %v1202
    %1205 = vbcast.lane.b32.xlu0 %v1203, 256
    %v1206 = vpop.permute.xlu0 %1205
    %v1207 = vlaneseq
    %v1208 = vshrl.u32 %v1207, 7
    %v1209 = vsub.s32 1, %v1208
    %v1210 = vrot.slane %v68, %v1209
    %1212 = vbcast.lane.b32.xlu0 %v1210, 256
    %v1213 = vpop.permute.xlu0 %1212
    %v1214 = vmul.f32 %v1206, %v1168
    %v1215 = vmul.f32 %v1206, %v1169
    %v1216 = vmul.f32 %v1213, %v1170
    %v1217 = vmul.f32 %v1213, %v1171
    %v1218 = vadd.f32 %v1196, %v1214
    %v1219 = vadd.f32 %v1197, %v1215
    %v1220 = vadd.f32 %v1198, %v1216
    %v1221 = vadd.f32 %v1199, %v1217
    %v1222 = vsel %vm639, %v1218, 0.0
    %v1223 = vrot.slane %v1222, 4
    %v1224 = vadd.f32 %v1222, %v1223
    %v1225 = vrot.slane %v1224, 2
    %v1226 = vadd.f32 %v1224, %v1225
    %v1227 = vrot.slane %v1226, 1
    %v1228 = vadd.f32 %v1226, %v1227
    %v1229 = vsel %vm639, %v1219, 0.0
    %v1230 = vrot.slane %v1229, 4
    %v1231 = vadd.f32 %v1229, %v1230
    %v1232 = vrot.slane %v1231, 2
    %v1233 = vadd.f32 %v1231, %v1232
    %v1234 = vrot.slane %v1233, 1
    %v1235 = vadd.f32 %v1233, %v1234
    %v1236 = vsel %vm639, %v1220, 0.0
    %v1237 = vrot.slane %v1236, 4
    %v1238 = vadd.f32 %v1236, %v1237
    %v1239 = vrot.slane %v1238, 2
    %v1240 = vadd.f32 %v1238, %v1239
    %v1241 = vrot.slane %v1240, 1
    %v1242 = vadd.f32 %v1240, %v1241
    %v1243 = vsel %vm639, %v1221, 0.0
    %v1244 = vrot.slane %v1243, 4
    %v1245 = vadd.f32 %v1243, %v1244
    %v1246 = vrot.slane %v1245, 2
    %v1247 = vadd.f32 %v1245, %v1246
    %v1248 = vrot.slane %v1247, 1
    %v1249 = vadd.f32 %v1247, %v1248
    %1251 = vset.pattern.permute.xlu0 0
    %1252 = vperm.xlu0 %1251, %v69
    %v1253 = vpop.permute.xlu0 %1252
    %v1254 = vrot.slane %v1253, 1
    %v1257 = vadd.f32 %v1228, %v1253
    %v1258 = vadd.f32 %v1235, %v1253
    %v1259 = vadd.f32 %v1242, %v1254
    %v1260 = vadd.f32 %v1249, %v1254
    %v1261 = vsub.f32 0.0, %v70
    %v1262 = vmul.f32 %v1261, 1.442695
    %v1263 = vpow.pop %v1262
    %v1264 = vadd.f32 %v1263, 1.0
    %v1265 = vrcp.pop %v1264
    %v1266 = vmul.f32 1.0, %v1265
    %v1267 = vlaneseq
    %v1268 = vshrl.u32 %v1267, 7
    %v1269 = vsub.s32 0, %v1268
    %v1270 = vrot.slane %v1266, %v1269
    %1272 = vbcast.lane.b32.xlu0 %v1270, 256
    %v1273 = vpop.permute.xlu0 %1272
    %v1278 = vrot.slane %v1259, 7
    %v1279 = vsel %vm965, %v1278, %v1257
    %v1280 = vrot.slane %v1260, 7
    %v1281 = vsel %vm965, %v1280, %v1258
    %v1284 = vmul.f32 %v1273, %v1279
    %v1285 = vmul.f32 %v1273, %v1281
    %v1286 = vsel %vm405, %v1284, 0.0
    %v1287 = vrot.slane %v1286, 4
    %v1288 = vadd.f32 %v1286, %v1287
    %v1289 = vrot.slane %v1288, 2
    %v1290 = vadd.f32 %v1288, %v1289
    %v1291 = vrot.slane %v1290, 1
    %v1292 = vadd.f32 %v1290, %v1291
    %v1293 = vsel %vm405, %v1285, 0.0
    %v1294 = vrot.slane %v1293, 4
    %v1295 = vadd.f32 %v1293, %v1294
    %v1296 = vrot.slane %v1295, 2
    %v1297 = vadd.f32 %v1295, %v1296
    %v1298 = vrot.slane %v1297, 1
    %v1299 = vadd.f32 %v1297, %v1298
    %v1302 = vcombine.low %v1292, %v1299
    %v1304 = vunpack.c.l.s4 1966171168
    %v1305 = vunpack.c.0.s8 %v1304
    %v1306 = vlaneseq
    %v1307 = vshrl.u32 %v1306, 7
    %v1308 = vsub.s32 %v1305, %v1307
    %v1309 = vrot.slane %v1302, %v1308
    %v1311 = vunpack.c.l.s4 1966171168
    %v1312 = vunpack.c.0.s8 %v1311
    %v1313 = vlaneseq
    %v1314 = vshrl.u32 %v1313, 7
    %v1315 = vsub.s32 %v1312, %v1314
    %v1316 = vrot.slane %v1309, %v1315
    %v1318 = vlaneseq
    %vm1319 = vcmp.ge.s32.totalorder %v1318, 0
    %vm1320 = vcmp.lt.s32.totalorder %v1318, 256
    %vm1321 = vmand %vm1319, %vm1320
    %1322 = vst.msk [vmem:[#allocation7] sm:$0x3] %vm1321, %v1316
    // Predicated region
    $region46: #{tpu_custom_call.1} parent=1 // pred_check
      _
    $region47: #{tpu_custom_call.1} parent=1 // pred_check_branch
      %1324 = sbr.rel (0) target = $region49
    $region48: #{tpu_custom_call.1} parent=1 // pred_region
      %s1326 = ssub.s32 32, 32
      %1327 = vsyncadd [#allocation4], %s1326
      %s1329 = sshll.u32 [#allocation7], 4
      %s1330 = int_to_ptr.vmem [resolvable:$true] %s1329
      %1332 = dma.vmem_to_hbm [thread:$0]  %s1330, 32, %s9, [#allocation4]
    $region49: #{tpu_custom_call.1} parent=1 // pred_fallthru
      _
    // Predicated region
    $region50: #{tpu_custom_call.1} parent=1 // pred_check
      _
    $region51: #{tpu_custom_call.1} parent=1 // pred_check_branch
      %1334 = sbr.rel (0) target = $region53
    $region52: #{tpu_custom_call.1} parent=1 // pred_region
      %1335 = dma.done [#allocation4], 32
    $region53: #{tpu_custom_call.1} parent=1 // pred_fallthru
      _
    %1336 = vsyncpa [#allocation3], 1
    %1337 = vsyncpa [#allocation6], 1
    %1338 = vsyncpa [#allocation4], 1

</llo_original>
